<compile_context>
chip_gen: v6e
topology: v6e:2x2x1
jax: 0.10.0
libtpu: 0.0.40
codegen_flags: <defaults>
</compile_context>

<pallas_src>
import jax
import jax.numpy as jnp
from jax.experimental import pallas as pl
from jax.experimental.pallas import tpu as pltpu

N_STATES = 8       # env.observation_space.shape[0]
N_ACTIONS = 4      # env.action_space.n
HIDDEN = 50
HIDDEN_PAD = 128   # lane/sublane-padded hidden width (zero-padded => identical math)

TILE_B = 1024      # batch tile (multiple of 128). v5e/v6e: consider 2048-4096.


# ---------------------------------------------------------------------------
# Kernels (feature-major: x_t (N_STATES, tile_b) -> y_t (N_ACTIONS, tile_b))
# ---------------------------------------------------------------------------
def _net_kernel(x_ref, w1_ref, b1_ref, w2_ref, b2_ref, y_ref):
    # fc1: (HIDDEN_PAD, N_STATES) @ (N_STATES, tile_b) with f32 accumulation.
    h = jnp.dot(w1_ref[...], x_ref[...], preferred_element_type=jnp.float32)
    h = jnp.maximum(h + b1_ref[...], 0.0)                # (HIDDEN_PAD, tile_b) f32
    # out: (N_ACTIONS, HIDDEN_PAD) @ (HIDDEN_PAD, tile_b); K=128 = one MXU tile.
    y = jnp.dot(w2_ref[...], h.astype(w2_ref.dtype),
                preferred_element_type=jnp.float32)
    y_ref[...] = (y + b2_ref[...]).astype(y_ref.dtype)


def _select_action_kernel(x_ref, w1_ref, b1_ref, w2_ref, b2_ref, act_ref):
    # Same forward as _net_kernel, plus a fused greedy-argmax epilogue.
    h = jnp.dot(w1_ref[...], x_ref[...], preferred_element_type=jnp.float32)
    h = jnp.maximum(h + b1_ref[...], 0.0)
    q = jnp.dot(w2_ref[...], h.astype(w2_ref.dtype),
                preferred_element_type=jnp.float32)
    q = q + b2_ref[...]                                   # (N_ACTIONS, B) f32
    qmax = jnp.max(q, axis=0, keepdims=True)              # (1, B)
    ids = jax.lax.broadcasted_iota(jnp.int32, q.shape, 0)
    # First index achieving the max (matches argmax tie-breaking).
    act = jnp.min(jnp.where(q == qmax, ids, N_ACTIONS), axis=0, keepdims=True)
    act_ref[...] = act.astype(jnp.int32)


def _cost_estimate(batch, x_itemsize, w_itemsize):
    flops = 2 * batch * (N_STATES * HIDDEN_PAD + HIDDEN_PAD * N_ACTIONS)
    bytes_accessed = (
        batch * N_STATES * x_itemsize                       # x read
        + batch * N_ACTIONS * 4                             # y write (f32)
        + (N_STATES * HIDDEN_PAD + HIDDEN_PAD * N_ACTIONS) * w_itemsize  # W1, W2
        + (HIDDEN_PAD + N_ACTIONS) * 4)                     # b1, b2 (f32)
    return pl.CostEstimate(flops=flops, transcendentals=0,
                           bytes_accessed=bytes_accessed)


# ---------------------------------------------------------------------------
# Wrappers
# ---------------------------------------------------------------------------
def net_forward(x_t, w1, b1, w2, b2, *, tile_b=TILE_B, compute_dtype=None):
    """Feature-major forward.

    x_t: (N_STATES, B).  w1: (HIDDEN_PAD, N_STATES), b1: (HIDDEN_PAD, 1),
    w2: (N_ACTIONS, HIDDEN_PAD), b2: (N_ACTIONS, 1).
    Returns Q-values (N_ACTIONS, B) float32.
    compute_dtype=jnp.bfloat16 casts x/W1/W2 (f32 accumulation is kept).
    """
    if compute_dtype is not None:
        x_t = x_t.astype(compute_dtype)
        w1 = w1.astype(compute_dtype)
        w2 = w2.astype(compute_dtype)

    B = x_t.shape[1]
    cost = _cost_estimate(B, x_t.dtype.itemsize, w1.dtype.itemsize)

    if B <= tile_b:
        # Single-block path (action selection / small replay batches): no grid,
        # everything VMEM-resident, one launch.
        vmem = pl.BlockSpec(memory_space=pltpu.MemorySpace.VMEM)
        return pl.pallas_call(
            _net_kernel,
            out_shape=jax.ShapeDtypeStruct((N_ACTIONS, B), jnp.float32),
            in_specs=[vmem, vmem, vmem, vmem, vmem],
            out_specs=vmem,
            cost_estimate=cost,
        )(x_t, w1, b1, w2, b2)

    # Pipelined 1-D grid over the batch (lane axis).  No jnp.pad: the ragged
    # last block is clipped by the BlockSpecs (OOB output columns dropped).
    grid = (pl.cdiv(B, tile_b),)
    return pl.pallas_call(
        _net_kernel,
        out_shape=jax.ShapeDtypeStruct((N_ACTIONS, B), jnp.float32),
        grid=grid,
        in_specs=[
            pl.BlockSpec((N_STATES, tile_b), lambda i: (0, i)),       # x tile
            pl.BlockSpec((HIDDEN_PAD, N_STATES), lambda i: (0, 0)),   # W1 resident
            pl.BlockSpec((HIDDEN_PAD, 1), lambda i: (0, 0)),          # b1 resident
            pl.BlockSpec((N_ACTIONS, HIDDEN_PAD), lambda i: (0, 0)),  # W2 resident
            pl.BlockSpec((N_ACTIONS, 1), lambda i: (0, 0)),           # b2 resident
        ],
        out_specs=pl.BlockSpec((N_ACTIONS, tile_b), lambda i: (0, i)),
        compiler_params=pltpu.CompilerParams(
            # Shard the batch grid across both TensorCores on v7x; harmless on
            # single-TC v5e/v6e.  Lane-dense double-buffered VMEM footprint is
            # ~150 KiB, far under every generation's scoped-VMEM default.
            dimension_semantics=("parallel",),
        ),
        cost_estimate=cost,
    )(x_t, w1, b1, w2, b2)


def net_select_action(x_t, w1, b1, w2, b2, *, compute_dtype=None):
    """Greedy action selection, argmax fused into the kernel epilogue.

    x_t: (N_STATES, B) with small B (per-step inference).  Returns (1, B) int32.
    """
    if compute_dtype is not None:
        x_t = x_t.astype(compute_dtype)
        w1 = w1.astype(compute_dtype)
        w2 = w2.astype(compute_dtype)

    B = x_t.shape[1]
    cost = _cost_estimate(B, x_t.dtype.itemsize, w1.dtype.itemsize)
    vmem = pl.BlockSpec(memory_space=pltpu.MemorySpace.VMEM)
    return pl.pallas_call(
        _select_action_kernel,
        out_shape=jax.ShapeDtypeStruct((1, B), jnp.int32),
        in_specs=[vmem, vmem, vmem, vmem, vmem],
        out_specs=vmem,
        cost_estimate=cost,
    )(x_t, w1, b1, w2, b2)


# ---------------------------------------------------------------------------
# Parameter init (mirrors the PyTorch module), hidden dim zero-padded to 128.
# ---------------------------------------------------------------------------
def init_params(key):
    """Weights ~ Normal(0, 0.1); biases use PyTorch Linear default
    U(-1/sqrt(fan_in), 1/sqrt(fan_in)).  PyTorch weights are (out, in), which is
    exactly the feature-major layout the kernel wants (no transpose).
    Returns (padded params for the kernel, unpadded params for reference)."""
    k1, k2, k3, k4 = jax.random.split(key, 4)
    w1_u = 0.1 * jax.random.normal(k1, (HIDDEN, N_STATES), jnp.float32)     # (50, 8)
    w2_u = 0.1 * jax.random.normal(k2, (N_ACTIONS, HIDDEN), jnp.float32)    # (4, 50)
    bound1 = 1.0 / jnp.sqrt(jnp.float32(N_STATES))
    bound2 = 1.0 / jnp.sqrt(jnp.float32(HIDDEN))
    b1_u = jax.random.uniform(k3, (HIDDEN, 1), jnp.float32, -bound1, bound1)
    b2_u = jax.random.uniform(k4, (N_ACTIONS, 1), jnp.float32, -bound2, bound2)

    # Pad hidden dim with EXACT zeros: ReLU(0 + 0) = 0 and the padded W2
    # columns are zero, so padded lanes contribute nothing to the output.
    w1 = jnp.zeros((HIDDEN_PAD, N_STATES), jnp.float32).at[:HIDDEN, :].set(w1_u)
    b1 = jnp.zeros((HIDDEN_PAD, 1), jnp.float32).at[:HIDDEN, :].set(b1_u)
    w2 = jnp.zeros((N_ACTIONS, HIDDEN_PAD), jnp.float32).at[:, :HIDDEN].set(w2_u)
    return (w1, b1, w2, b2_u), (w1_u, b1_u, w2_u, b2_u)


if __name__ == "__main__":
    key = jax.random.PRNGKey(0)
    k_params, k_small, k_large = jax.random.split(key, 3)
    (w1, b1, w2, b2), (w1_u, b1_u, w2_u, b2_u) = init_params(k_params)

    HP = jax.lax.Precision.HIGHEST

    def ref_forward(xt):  # true-f32 reference, feature-major
        h = jnp.maximum(jnp.dot(w1_u, xt, precision=HP) + b1_u, 0.0)
        return jnp.dot(w2_u, h, precision=HP) + b2_u

    # --- Small batch (action-selection, single-block path) ---
    B_small = 2
    x_small = jax.random.normal(k_small, (N_STATES, B_small), jnp.float32)
    y_small = net_forward(x_small, w1, b1, w2, b2)
    jax.block_until_ready(y_small)
    ref_small = ref_forward(x_small)
    assert y_small.shape == (N_ACTIONS, B_small)
    assert jnp.allclose(y_small, ref_small, atol=1e-5, rtol=1e-5)

    # Fused-argmax action selection (same single launch).
    acts = net_select_action(x_small, w1, b1, w2, b2)
    jax.block_until_ready(acts)
    assert acts.shape == (1, B_small)
    assert jnp.array_equal(acts[0],
                           jnp.argmax(ref_small, axis=0).astype(jnp.int32))

    # --- Batch path: cdiv grid with a ragged last tile (no jnp.pad) ---
    B_large = 2304  # not a multiple of TILE_B -> exercises OOB-clipped tail
    x_large = jax.random.normal(k_large, (N_STATES, B_large), jnp.float32)
    y_large = net_forward(x_large, w1, b1, w2, b2)
    jax.block_until_ready(y_large)
    ref_large = ref_forward(x_large)
    assert y_large.shape == (N_ACTIONS, B_large)
    assert jnp.allclose(y_large, ref_large, atol=1e-5, rtol=1e-5)

    # --- bf16 input/weight cast (HBM-traffic halving), f32 accumulation ---
    y_bf16 = net_forward(x_large, w1, b1, w2, b2, compute_dtype=jnp.bfloat16)
    jax.block_until_ready(y_bf16)
    assert jnp.allclose(y_bf16, ref_large, atol=2e-2, rtol=2e-2)

    print("KERNEL_OK")
</pallas_src>

<mosaic_0001>
module attributes {stable_mosaic.version = 11 : i64} {
  func.func @_net_kernel(%arg0: memref<8x2xf32, #tpu.memory_space<vmem>>, %arg1: memref<128x8xf32, #tpu.memory_space<vmem>>, %arg2: memref<128x1xf32, #tpu.memory_space<vmem>>, %arg3: memref<4x128xf32, #tpu.memory_space<vmem>>, %arg4: memref<4x1xf32, #tpu.memory_space<vmem>>, %arg5: memref<4x2xf32, #tpu.memory_space<vmem>>) attributes {dimension_semantics = [], scalar_prefetch = 0 : i64, scratch_operands = 0 : i64, tpu.core_type = #tpu.core_type<tc>} {
    %c0 = arith.constant 0 : index
    %c0_0 = arith.constant 0 : index
    %0 = vector.load %arg1[%c0, %c0_0] : memref<128x8xf32, #tpu.memory_space<vmem>>, vector<128x8xf32>
    %c0_1 = arith.constant 0 : index
    %c0_2 = arith.constant 0 : index
    %1 = vector.load %arg0[%c0_1, %c0_2] : memref<8x2xf32, #tpu.memory_space<vmem>>, vector<8x2xf32>
    %cst = arith.constant dense<0.000000e+00> : vector<128x2xf32>
    %2 = tpu.matmul %0, %1, %cst {dimension_numbers = #tpu.dot_dimension_numbers<[1], [0], [0], [1], [0, 0, 1, 1], [], []>} : vector<128x8xf32>, vector<8x2xf32>, vector<128x2xf32> -> vector<128x2xf32>
    %c0_3 = arith.constant 0 : index
    %c0_4 = arith.constant 0 : index
    %3 = vector.load %arg2[%c0_3, %c0_4] : memref<128x1xf32, #tpu.memory_space<vmem>>, vector<128x1xf32>
    %4 = vector.broadcast %3 : vector<128x1xf32> to vector<128x2xf32>
    %5 = arith.addf %2, %4 : vector<128x2xf32>
    %cst_5 = arith.constant 0.000000e+00 : f32
    %6 = vector.broadcast %cst_5 : f32 to vector<128x2xf32>
    %7 = arith.maximumf %5, %6 : vector<128x2xf32>
    %c0_6 = arith.constant 0 : index
    %c0_7 = arith.constant 0 : index
    %8 = vector.load %arg3[%c0_6, %c0_7] : memref<4x128xf32, #tpu.memory_space<vmem>>, vector<4x128xf32>
    %cst_8 = arith.constant dense<0.000000e+00> : vector<4x2xf32>
    %9 = tpu.matmul %8, %7, %cst_8 {dimension_numbers = #tpu.dot_dimension_numbers<[1], [0], [0], [1], [0, 0, 1, 1], [], []>} : vector<4x128xf32>, vector<128x2xf32>, vector<4x2xf32> -> vector<4x2xf32>
    %c0_9 = arith.constant 0 : index
    %c0_10 = arith.constant 0 : index
    %10 = vector.load %arg4[%c0_9, %c0_10] : memref<4x1xf32, #tpu.memory_space<vmem>>, vector<4x1xf32>
    %11 = vector.broadcast %10 : vector<4x1xf32> to vector<4x2xf32>
    %12 = arith.addf %9, %11 : vector<4x2xf32>
    %c0_11 = arith.constant 0 : index
    %c0_12 = arith.constant 0 : index
    %13 = vector.load %arg5[%c0_11, %c0_12] : memref<4x2xf32, #tpu.memory_space<vmem>>, vector<4x2xf32>
    tpu.vector_store %arg5[%c0_11, %c0_12], %12 {strides = array<i32>} : memref<4x2xf32, #tpu.memory_space<vmem>>, vector<4x2xf32>,
    return
  }
}

</mosaic_0001>

<llo_original>
// kernel: tpu_custom_call.1
$region0: #{tpu_custom_call.1}
  #allocation0 [shape = 'u32[]', space=smem, size = 0x4, offset = 0x4, fixed_abs, tag = 'smem constant byte address 0x4 - core index']
  #allocation1 [shape = 'u32[144,128]{1,0:T(1,128)}', space=vmem, size = 0x12000, scoped, tag = 'internal scratch']
  %s0 = inlined_call_operand.vmem [shape: f32[8,2], index: 0, kind: input, shape index: {}]
  %s1 = inlined_call_operand.vmem [shape: f32[128,8], index: 1, kind: input, shape index: {}]
  %s2 = inlined_call_operand.vmem [shape: f32[128,1], index: 2, kind: input, shape index: {}]
  %s3 = inlined_call_operand.vmem [shape: f32[4,128], index: 3, kind: input, shape index: {}]
  %s4 = inlined_call_operand.vmem [shape: f32[4,1], index: 4, kind: input, shape index: {}]
  %s5 = inlined_call_operand.vmem [shape: f32[4,2], index: 5, kind: output, shape index: {}]
  %s6 = sld [smem:[#allocation0]]
  $region30: #{tpu_custom_call.1} parent=0
    _
  %s8 = ssub.s32 1, %s6
  %s9 = scalar_select 0, %s8, %s6
  // Predicated region
  $region2: #{tpu_custom_call.1} parent=0 // pred_check
    _
  $region3: #{tpu_custom_call.1} parent=0 // pred_check_branch
    %11 = sbr.rel (0) target = $region5
  $region4: #{tpu_custom_call.1} parent=0 // pred_region
    _
  $region5: #{tpu_custom_call.1} parent=0 // pred_fallthru
    _
  // Predicated region
  $region6: #{tpu_custom_call.1} parent=0 // pred_check
    _
  $region7: #{tpu_custom_call.1} parent=0 // pred_check_branch
    %13 = sbr.rel (0) target = $region9
  $region8: #{tpu_custom_call.1} parent=0 // pred_region
    _
  $region9: #{tpu_custom_call.1} parent=0 // pred_fallthru
    _
  // Predicated region
  $region10: #{tpu_custom_call.1} parent=0 // pred_check
    _
  $region11: #{tpu_custom_call.1} parent=0 // pred_check_branch
    %15 = sbr.rel (0) target = $region13
  $region12: #{tpu_custom_call.1} parent=0 // pred_region
    _
  $region13: #{tpu_custom_call.1} parent=0 // pred_fallthru
    _
  // Predicated region
  $region14: #{tpu_custom_call.1} parent=0 // pred_check
    _
  $region15: #{tpu_custom_call.1} parent=0 // pred_check_branch
    %17 = sbr.rel (0) target = $region17
  $region16: #{tpu_custom_call.1} parent=0 // pred_region
    _
  $region17: #{tpu_custom_call.1} parent=0 // pred_fallthru
    _
  // Predicated region
  $region18: #{tpu_custom_call.1} parent=0 // pred_check
    _
  $region19: #{tpu_custom_call.1} parent=0 // pred_check_branch
    %19 = sbr.rel (0) target = $region21
  $region20: #{tpu_custom_call.1} parent=0 // pred_region
    _
  $region21: #{tpu_custom_call.1} parent=0 // pred_fallthru
    _
  %v20 = vld [vmem:[%s1] sm:$0xff]
  %v21 = vld [vmem:[%s1 + $0x8] sm:$0xff]
  %v22 = vld [vmem:[%s1 + $0x10] sm:$0xff]
  %v23 = vld [vmem:[%s1 + $0x18] sm:$0xff]
  %v24 = vld [vmem:[%s1 + $0x20] sm:$0xff]
  %v25 = vld [vmem:[%s1 + $0x28] sm:$0xff]
  %v26 = vld [vmem:[%s1 + $0x30] sm:$0xff]
  %v27 = vld [vmem:[%s1 + $0x38] sm:$0xff]
  %v28 = vld [vmem:[%s1 + $0x40] sm:$0xff]
  %v29 = vld [vmem:[%s1 + $0x48] sm:$0xff]
  %v30 = vld [vmem:[%s1 + $0x50] sm:$0xff]
  %v31 = vld [vmem:[%s1 + $0x58] sm:$0xff]
  %v32 = vld [vmem:[%s1 + $0x60] sm:$0xff]
  %v33 = vld [vmem:[%s1 + $0x68] sm:$0xff]
  %v34 = vld [vmem:[%s1 + $0x70] sm:$0xff]
  %v35 = vld [vmem:[%s1 + $0x78] sm:$0xff]
  %v36 = vld [vmem:[%s0] sm:$0xff]
  %v37 = vld [vmem:[%s2] sm:$0xff]
  %v38 = vld [vmem:[%s2 + $0x8] sm:$0xff]
  %v39 = vld [vmem:[%s2 + $0x10] sm:$0xff]
  %v40 = vld [vmem:[%s2 + $0x18] sm:$0xff]
  %v41 = vld [vmem:[%s2 + $0x20] sm:$0xff]
  %v42 = vld [vmem:[%s2 + $0x28] sm:$0xff]
  %v43 = vld [vmem:[%s2 + $0x30] sm:$0xff]
  %v44 = vld [vmem:[%s2 + $0x38] sm:$0xff]
  %v45 = vld [vmem:[%s2 + $0x40] sm:$0xff]
  %v46 = vld [vmem:[%s2 + $0x48] sm:$0xff]
  %v47 = vld [vmem:[%s2 + $0x50] sm:$0xff]
  %v48 = vld [vmem:[%s2 + $0x58] sm:$0xff]
  %v49 = vld [vmem:[%s2 + $0x60] sm:$0xff]
  %v50 = vld [vmem:[%s2 + $0x68] sm:$0xff]
  %v51 = vld [vmem:[%s2 + $0x70] sm:$0xff]
  %v52 = vld [vmem:[%s2 + $0x78] sm:$0xff]
  %54 = vset.pattern.permute.xlu0 0
  %55 = vperm.xlu0 %54, %v37
  %v56 = vpop.permute.xlu0 %55
  %59 = vset.pattern.permute.xlu0 0
  %60 = vperm.xlu0 %59, %v38
  %v61 = vpop.permute.xlu0 %60
  %64 = vset.pattern.permute.xlu0 0
  %65 = vperm.xlu0 %64, %v39
  %v66 = vpop.permute.xlu0 %65
  %69 = vset.pattern.permute.xlu0 0
  %70 = vperm.xlu0 %69, %v40
  %v71 = vpop.permute.xlu0 %70
  %74 = vset.pattern.permute.xlu0 0
  %75 = vperm.xlu0 %74, %v41
  %v76 = vpop.permute.xlu0 %75
  %79 = vset.pattern.permute.xlu0 0
  %80 = vperm.xlu0 %79, %v42
  %v81 = vpop.permute.xlu0 %80
  %84 = vset.pattern.permute.xlu0 0
  %85 = vperm.xlu0 %84, %v43
  %v86 = vpop.permute.xlu0 %85
  %89 = vset.pattern.permute.xlu0 0
  %90 = vperm.xlu0 %89, %v44
  %v91 = vpop.permute.xlu0 %90
  %94 = vset.pattern.permute.xlu0 0
  %95 = vperm.xlu0 %94, %v45
  %v96 = vpop.permute.xlu0 %95
  %99 = vset.pattern.permute.xlu0 0
  %100 = vperm.xlu0 %99, %v46
  %v101 = vpop.permute.xlu0 %100
  %104 = vset.pattern.permute.xlu0 0
  %105 = vperm.xlu0 %104, %v47
  %v106 = vpop.permute.xlu0 %105
  %109 = vset.pattern.permute.xlu0 0
  %110 = vperm.xlu0 %109, %v48
  %v111 = vpop.permute.xlu0 %110
  %114 = vset.pattern.permute.xlu0 0
  %115 = vperm.xlu0 %114, %v49
  %v116 = vpop.permute.xlu0 %115
  %119 = vset.pattern.permute.xlu0 0
  %120 = vperm.xlu0 %119, %v50
  %v121 = vpop.permute.xlu0 %120
  %124 = vset.pattern.permute.xlu0 0
  %125 = vperm.xlu0 %124, %v51
  %v126 = vpop.permute.xlu0 %125
  %129 = vset.pattern.permute.xlu0 0
  %130 = vperm.xlu0 %129, %v52
  %v131 = vpop.permute.xlu0 %130
  %vm133 = vcmask 64512
  %v135 = vsel %vm133, %v20, 0
  %v138 = vsel %vm133, %v21, 0
  %v141 = vsel %vm133, %v22, 0
  %v144 = vsel %vm133, %v23, 0
  %v147 = vsel %vm133, %v24, 0
  %v150 = vsel %vm133, %v25, 0
  %v153 = vsel %vm133, %v26, 0
  %v156 = vsel %vm133, %v27, 0
  %v159 = vsel %vm133, %v28, 0
  %v162 = vsel %vm133, %v29, 0
  %v165 = vsel %vm133, %v30, 0
  %v168 = vsel %vm133, %v31, 0
  %v171 = vsel %vm133, %v32, 0
  %v174 = vsel %vm133, %v33, 0
  %v177 = vsel %vm133, %v34, 0
  %v180 = vsel %vm133, %v35, 0
  %182 = vmatprep.subr.mxu0 0.0
  %183 = vmatpush1.msra.mxu0 0.0
  %184 = vmatprep.subr.mxu0 0.0
  %185 = vmatpush1.msra.mxu0 0.0
  %186 = vmatprep.subr.mxu0 0.0
  %187 = vmatpush1.msra.mxu0 0.0
  %188 = vmatprep.subr.mxu0 0.0
  %189 = vmatpush1.msra.mxu0 0.0
  %190 = vmatprep.subr.mxu0 0.0
  %191 = vmatpush1.msra.mxu0 0.0
  %192 = vmatprep.subr.mxu0 0.0
  %193 = vmatpush1.msra.mxu0 0.0
  %194 = vmatprep.subr.mxu0 0.0
  %195 = vmatpush1.msra.mxu0 0.0
  %196 = vmatprep.subr.mxu0 0.0
  %197 = vmatpush1.msra.mxu0 0.0
  %198 = vmatprep.subr.mxu0 0.0
  %199 = vmatpush1.msra.mxu0 0.0
  %200 = vmatprep.subr.mxu0 0.0
  %201 = vmatpush1.msra.mxu0 0.0
  %202 = vmatprep.subr.mxu0 0.0
  %203 = vmatpush1.msra.mxu0 0.0
  %204 = vmatprep.subr.mxu0 0.0
  %205 = vmatpush1.msra.mxu0 0.0
  %206 = vmatprep.subr.mxu0 0.0
  %207 = vmatpush1.msra.mxu0 0.0
  %208 = vmatprep.subr.mxu0 0.0
  %209 = vmatpush1.msra.mxu0 0.0
  %210 = vmatprep.subr.mxu0 0.0
  %211 = vmatpush1.msra.mxu0 0.0
  %212 = vmatprep.subr.mxu0 0.0
  %213 = vmatpush1.msra.mxu0 %v36
  %214 = vmatprep.subr.mxu0 0.0
  %215 = vmatpush2.msra.mxu0 0.0
  %216 = vmatprep.subr.mxu0 0.0
  %217 = vmatpush2.msra.mxu0 0.0
  %218 = vmatprep.subr.mxu0 0.0
  %219 = vmatpush2.msra.mxu0 0.0
  %220 = vmatprep.subr.mxu0 0.0
  %221 = vmatpush2.msra.mxu0 0.0
  %222 = vmatprep.subr.mxu0 0.0
  %223 = vmatpush2.msra.mxu0 0.0
  %224 = vmatprep.subr.mxu0 0.0
  %225 = vmatpush2.msra.mxu0 0.0
  %226 = vmatprep.subr.mxu0 0.0
  %227 = vmatpush2.msra.mxu0 0.0
  %228 = vmatprep.subr.mxu0 0.0
  %229 = vmatpush2.msra.mxu0 0.0
  %230 = vmatprep.subr.mxu0 0.0
  %231 = vmatpush2.msra.mxu0 0.0
  %232 = vmatprep.subr.mxu0 0.0
  %233 = vmatpush2.msra.mxu0 0.0
  %234 = vmatprep.subr.mxu0 0.0
  %235 = vmatpush2.msra.mxu0 0.0
  %236 = vmatprep.subr.mxu0 0.0
  %237 = vmatpush2.msra.mxu0 0.0
  %238 = vmatprep.subr.mxu0 0.0
  %239 = vmatpush2.msra.mxu0 0.0
  %240 = vmatprep.subr.mxu0 0.0
  %241 = vmatpush2.msra.mxu0 0.0
  %242 = vmatprep.subr.mxu0 0.0
  %243 = vmatpush2.msra.mxu0 0.0
  %244 = vmatprep.subr.mxu0 0.0
  %245 = vmatpush2.msra.mxu0 0.0
  %246 = vmatprep.mubr.f32.mxu0 0.0
  %247 = vmatmul.mubr.f32.gmra.mxu0 %v135
  %v248 = vpop.f32.mrf.mxu0
  %v249 = vadd.f32 %v56, %v248
  %v250 = vpop.f32.mrf.mxu0
  %251 = vmatprep.mubr.f32.mxu0 0.0
  %252 = vmatmul.mubr.f32.gmra.mxu0 %v138
  %v253 = vpop.f32.mrf.mxu0
  %v254 = vadd.f32 %v61, %v253
  %v255 = vpop.f32.mrf.mxu0
  %256 = vmatprep.mubr.f32.mxu0 0.0
  %257 = vmatmul.mubr.f32.gmra.mxu0 %v141
  %v258 = vpop.f32.mrf.mxu0
  %v259 = vadd.f32 %v66, %v258
  %v260 = vpop.f32.mrf.mxu0
  %261 = vmatprep.mubr.f32.mxu0 0.0
  %262 = vmatmul.mubr.f32.gmra.mxu0 %v144
  %v263 = vpop.f32.mrf.mxu0
  %v264 = vadd.f32 %v71, %v263
  %v265 = vpop.f32.mrf.mxu0
  %266 = vmatprep.mubr.f32.mxu0 0.0
  %267 = vmatmul.mubr.f32.gmra.mxu0 %v147
  %v268 = vpop.f32.mrf.mxu0
  %v269 = vadd.f32 %v76, %v268
  %v270 = vpop.f32.mrf.mxu0
  %271 = vmatprep.mubr.f32.mxu0 0.0
  %272 = vmatmul.mubr.f32.gmra.mxu0 %v150
  %v273 = vpop.f32.mrf.mxu0
  %v274 = vadd.f32 %v81, %v273
  %v275 = vpop.f32.mrf.mxu0
  %276 = vmatprep.mubr.f32.mxu0 0.0
  %277 = vmatmul.mubr.f32.gmra.mxu0 %v153
  %v278 = vpop.f32.mrf.mxu0
  %v279 = vadd.f32 %v86, %v278
  %v280 = vpop.f32.mrf.mxu0
  %281 = vmatprep.mubr.f32.mxu0 0.0
  %282 = vmatmul.mubr.f32.gmra.mxu0 %v156
  %v283 = vpop.f32.mrf.mxu0
  %v284 = vadd.f32 %v91, %v283
  %v285 = vpop.f32.mrf.mxu0
  %286 = vmatprep.mubr.f32.mxu0 0.0
  %287 = vmatmul.mubr.f32.gmra.mxu0 %v159
  %v288 = vpop.f32.mrf.mxu0
  %v289 = vadd.f32 %v96, %v288
  %v290 = vpop.f32.mrf.mxu0
  %291 = vmatprep.mubr.f32.mxu0 0.0
  %292 = vmatmul.mubr.f32.gmra.mxu0 %v162
  %v293 = vpop.f32.mrf.mxu0
  %v294 = vadd.f32 %v101, %v293
  %v295 = vpop.f32.mrf.mxu0
  %296 = vmatprep.mubr.f32.mxu0 0.0
  %297 = vmatmul.mubr.f32.gmra.mxu0 %v165
  %v298 = vpop.f32.mrf.mxu0
  %v299 = vadd.f32 %v106, %v298
  %v300 = vpop.f32.mrf.mxu0
  %301 = vmatprep.mubr.f32.mxu0 0.0
  %302 = vmatmul.mubr.f32.gmra.mxu0 %v168
  %v303 = vpop.f32.mrf.mxu0
  %v304 = vadd.f32 %v111, %v303
  %v305 = vpop.f32.mrf.mxu0
  %306 = vmatprep.mubr.f32.mxu0 0.0
  %307 = vmatmul.mubr.f32.gmra.mxu0 %v171
  %v308 = vpop.f32.mrf.mxu0
  %v309 = vadd.f32 %v116, %v308
  %v310 = vpop.f32.mrf.mxu0
  %311 = vmatprep.mubr.f32.mxu0 0.0
  %312 = vmatmul.mubr.f32.gmra.mxu0 %v174
  %v313 = vpop.f32.mrf.mxu0
  %v314 = vadd.f32 %v121, %v313
  %v315 = vpop.f32.mrf.mxu0
  %316 = vmatprep.mubr.f32.mxu0 0.0
  %317 = vmatmul.mubr.f32.gmra.mxu0 %v177
  %v318 = vpop.f32.mrf.mxu0
  %v319 = vadd.f32 %v126, %v318
  %v320 = vpop.f32.mrf.mxu0
  %321 = vmatprep.mubr.f32.mxu0 0.0
  %322 = vmatmul.mubr.f32.gmra.mxu0 %v180
  %v323 = vpop.f32.mrf.mxu0
  %v324 = vadd.f32 %v131, %v323
  %v325 = vpop.f32.mrf.mxu0
  %326 = vdwg.mxu0
  %v327 = vmax.f32 %v249, 0.0
  %v328 = vmax.f32 %v254, 0.0
  %v329 = vmax.f32 %v259, 0.0
  %v330 = vmax.f32 %v264, 0.0
  %v331 = vmax.f32 %v269, 0.0
  %v332 = vmax.f32 %v274, 0.0
  %v333 = vmax.f32 %v279, 0.0
  %v334 = vmax.f32 %v284, 0.0
  %v335 = vmax.f32 %v289, 0.0
  %v336 = vmax.f32 %v294, 0.0
  %v337 = vmax.f32 %v299, 0.0
  %v338 = vmax.f32 %v304, 0.0
  %v339 = vmax.f32 %v309, 0.0
  %v340 = vmax.f32 %v314, 0.0
  %v341 = vmax.f32 %v319, 0.0
  %v342 = vmax.f32 %v324, 0.0
  %v343 = vld [vmem:[%s3] sm:$0xf]
  %v344 = vld [vmem:[%s4] sm:$0xf]
  %346 = vset.pattern.permute.xlu0 0
  %347 = vperm.xlu0 %346, %v344
  %v348 = vpop.permute.xlu0 %347
  %350 = vmatprep.subr.mxu0 0.0
  %351 = vmatpush1.msra.mxu0 %v342
  %352 = vmatprep.subr.mxu0 0.0
  %353 = vmatpush1.msra.mxu0 %v341
  %354 = vmatprep.subr.mxu0 0.0
  %355 = vmatpush1.msra.mxu0 %v340
  %356 = vmatprep.subr.mxu0 0.0
  %357 = vmatpush1.msra.mxu0 %v339
  %358 = vmatprep.subr.mxu0 0.0
  %359 = vmatpush1.msra.mxu0 %v338
  %360 = vmatprep.subr.mxu0 0.0
  %361 = vmatpush1.msra.mxu0 %v337
  %362 = vmatprep.subr.mxu0 0.0
  %363 = vmatpush1.msra.mxu0 %v336
  %364 = vmatprep.subr.mxu0 0.0
  %365 = vmatpush1.msra.mxu0 %v335
  %366 = vmatprep.subr.mxu0 0.0
  %367 = vmatpush1.msra.mxu0 %v334
  %368 = vmatprep.subr.mxu0 0.0
  %369 = vmatpush1.msra.mxu0 %v333
  %370 = vmatprep.subr.mxu0 0.0
  %371 = vmatpush1.msra.mxu0 %v332
  %372 = vmatprep.subr.mxu0 0.0
  %373 = vmatpush1.msra.mxu0 %v331
  %374 = vmatprep.subr.mxu0 0.0
  %375 = vmatpush1.msra.mxu0 %v330
  %376 = vmatprep.subr.mxu0 0.0
  %377 = vmatpush1.msra.mxu0 %v329
  %378 = vmatprep.subr.mxu0 0.0
  %379 = vmatpush1.msra.mxu0 %v328
  %380 = vmatprep.subr.mxu0 0.0
  %381 = vmatpush1.msra.mxu0 %v327
  %382 = vmatprep.subr.mxu0 0.0
  %383 = vmatpush2.msra.mxu0 0.0
  %384 = vmatprep.subr.mxu0 0.0
  %385 = vmatpush2.msra.mxu0 0.0
  %386 = vmatprep.subr.mxu0 0.0
  %387 = vmatpush2.msra.mxu0 0.0
  %388 = vmatprep.subr.mxu0 0.0
  %389 = vmatpush2.msra.mxu0 0.0
  %390 = vmatprep.subr.mxu0 0.0
  %391 = vmatpush2.msra.mxu0 0.0
  %392 = vmatprep.subr.mxu0 0.0
  %393 = vmatpush2.msra.mxu0 0.0
  %394 = vmatprep.subr.mxu0 0.0
  %395 = vmatpush2.msra.mxu0 0.0
  %396 = vmatprep.subr.mxu0 0.0
  %397 = vmatpush2.msra.mxu0 0.0
  %398 = vmatprep.subr.mxu0 0.0
  %399 = vmatpush2.msra.mxu0 0.0
  %400 = vmatprep.subr.mxu0 0.0
  %401 = vmatpush2.msra.mxu0 0.0
  %402 = vmatprep.subr.mxu0 0.0
  %403 = vmatpush2.msra.mxu0 0.0
  %404 = vmatprep.subr.mxu0 0.0
  %405 = vmatpush2.msra.mxu0 0.0
  %406 = vmatprep.subr.mxu0 0.0
  %407 = vmatpush2.msra.mxu0 0.0
  %408 = vmatprep.subr.mxu0 0.0
  %409 = vmatpush2.msra.mxu0 0.0
  %410 = vmatprep.subr.mxu0 0.0
  %411 = vmatpush2.msra.mxu0 0.0
  %412 = vmatprep.subr.mxu0 0.0
  %413 = vmatpush2.msra.mxu0 0.0
  %414 = vmatprep.mubr.f32.mxu0 0.0
  %415 = vmatmul.mubr.f32.gmra.mxu0 %v343
  %v416 = vpop.f32.mrf.mxu0
  %v417 = vadd.f32 %v348, %v416
  %v418 = vpop.f32.mrf.mxu0
  %419 = vdwg.mxu0
  %vm420 = vcmask 11264
  %421 = vst.msk [vmem:[%s5] sm:$0xf] %vm420, %v417
  // Predicated region
  $region22: #{tpu_custom_call.1} parent=0 // pred_check
    _
  $region23: #{tpu_custom_call.1} parent=0 // pred_check_branch
    %423 = sbr.rel (0) target = $region25
  $region24: #{tpu_custom_call.1} parent=0 // pred_region
    _
  $region25: #{tpu_custom_call.1} parent=0 // pred_fallthru
    _
  // Predicated region
  $region26: #{tpu_custom_call.1} parent=0 // pred_check
    _
  $region27: #{tpu_custom_call.1} parent=0 // pred_check_branch
    %425 = sbr.rel (0) target = $region29
  $region28: #{tpu_custom_call.1} parent=0 // pred_region
    _
  $region29: #{tpu_custom_call.1} parent=0 // pred_fallthru
    _

</llo_original>
